<compile_context>
chip_gen: v6e
topology: v6e:2x2x1
jax: 0.10.0
libtpu: 0.0.40
codegen_flags: <defaults>
</compile_context>

<pallas_src>
import functools

import jax
import jax.numpy as jnp
from jax.experimental import pallas as pl
from jax.experimental.pallas import tpu as pltpu


def _round_up(x, m):
    return (x + m - 1) // m * m


def _cdiv(a, b):
    return -(-a // b)


# --------------------------------------------------------------------------
# Kernels
# --------------------------------------------------------------------------
def _cbr_kernel_resident_w(p_ref, w_ref, bias_ref, o_ref):
    """Single-K-step kernel: weight block constant across M tiles (resident).

    p_ref:    (tile_m, k_pad)   bf16 im2col patch tile
    w_ref:    (k_pad, oc_blk)   bf16 conv weight (BN scale pre-folded)
    bias_ref: (1, oc_blk)       f32 folded bias
    o_ref:    (tile_m, oc_blk)  output tile (lane-dense: oc_blk % 128 == 0)
    """
    y = jnp.dot(p_ref[...], w_ref[...], preferred_element_type=jnp.float32)
    o_ref[...] = jnp.maximum(y + bias_ref[...], 0.0).astype(o_ref.dtype)


def _cbr_kernel_multi_k(p_ref, w_ref, bias_ref, o_ref, acc_ref):
    """Fallback for very large K: reduction over grid axis 2 with f32 acc."""
    kk = pl.program_id(2)

    @pl.when(kk == 0)
    def _():
        acc_ref[...] = jnp.zeros_like(acc_ref)

    acc_ref[...] += jnp.dot(p_ref[...], w_ref[...],
                            preferred_element_type=jnp.float32)

    @pl.when(kk == pl.num_programs(2) - 1)
    def _():
        # Epilogue in f32 (v5e has no bf16 VPU); hidden under the MXU slot.
        y = acc_ref[...] + bias_ref[...]
        o_ref[...] = jnp.maximum(y, 0.0).astype(o_ref.dtype)


# --------------------------------------------------------------------------
# Plain-JAX glue
# --------------------------------------------------------------------------
def _im2col_nhwc(x_nhwc, kernel_size, stride, padding, dilation):
    """x: (N, H, W, C) -> patches (N*Ho*Wo, KH*KW*C) with K ordered (KH, KW, C).

    Each tap is a contiguous strided slice; concatenating on the channel axis
    yields the (KH, KW, C) K ordering directly (no transpose of the big
    patch tensor).
    """
    n, h, w, c = x_nhwc.shape
    kh = kw = kernel_size
    h_out = (h + 2 * padding - dilation * (kh - 1) - 1) // stride + 1
    w_out = (w + 2 * padding - dilation * (kw - 1) - 1) // stride + 1

    x_pad = jnp.pad(x_nhwc,
                    ((0, 0), (padding, padding), (padding, padding), (0, 0)))

    taps = []
    for i in range(kh):
        for j in range(kw):
            hs = i * dilation
            ws = j * dilation
            sl = x_pad[:,
                       hs:hs + (h_out - 1) * stride + 1:stride,
                       ws:ws + (w_out - 1) * stride + 1:stride,
                       :]                                   # (N, Ho, Wo, C)
            taps.append(sl)
    patches = jnp.concatenate(taps, axis=-1)                # (N, Ho, Wo, KH*KW*C)
    return patches.reshape(n * h_out * w_out, kh * kw * c), h_out, w_out


def _tpu_generation():
    """Best-effort chip probe: (num_tensorcores, vmem_capacity_bytes)."""
    num_cores, vmem = 1, 128 * 1024 * 1024
    try:
        kind = (jax.devices()[0].device_kind or "").lower()
    except Exception:
        kind = ""
    if "v7" in kind:
        num_cores, vmem = 2, 64 * 1024 * 1024
    try:
        vmem = int(pltpu.get_tpu_info().vmem_capacity_bytes)
    except Exception:
        pass
    return num_cores, vmem


@functools.partial(jax.jit, static_argnames=("kernel_size", "stride", "padding",
                                             "dilation", "max_tile_m",
                                             "out_dtype", "nchw_output"))
def cbr_forward(x, conv_w, conv_b, gamma, beta, running_mean, running_var,
                *, kernel_size=3, stride=1, padding=1, dilation=1,
                eps=1e-5, max_tile_m=2048, out_dtype=jnp.float32,
                nchw_output=True):
    """x: (N, C_in, H, W) NCHW f32 -> (N, C_out, H_out, W_out) NCHW (default)."""
    n, c_in, _, _ = x.shape
    c_out = conv_w.shape[0]
    k = c_in * kernel_size * kernel_size

    num_cores, vmem_cap = _tpu_generation()
    # Leave headroom for compiler scratch; cap well under physical VMEM.
    vmem_budget = min(vmem_cap * 3 // 4, 96 * 1024 * 1024)

    # ---- fold BN into the conv weight / a single f32 bias vector ---------
    scale = gamma / jnp.sqrt(running_var + eps)                        # (OC,)
    bias = (conv_b - running_mean) * scale + beta                      # (OC,)
    # K order (KH, KW, C) to match the NHWC im2col; permuting the tiny weight
    # instead of the huge patch tensor.
    w_mat = jnp.transpose(conv_w, (2, 3, 1, 0)).reshape(k, c_out)      # (K, OC)
    w_mat = w_mat * scale[None, :]

    # ---- im2col in bf16 (halves the patch-matrix HBM traffic) ------------
    x_nhwc = jnp.transpose(x.astype(jnp.bfloat16), (0, 2, 3, 1))       # NHWC bf16
    patches, h_out, w_out = _im2col_nhwc(x_nhwc, kernel_size, stride,
                                         padding, dilation)
    m = patches.shape[0]

    # ---- OC blocking (lane-dense output; grid axis only for wide convs) --
    oc_pad = _round_up(c_out, 128)
    if oc_pad > 512:
        oc_blk = 256                          # 256-deep MXU fill on v6e/v7x
        oc_pad = _round_up(oc_pad, oc_blk)
    else:
        oc_blk = oc_pad
    num_oc = oc_pad // oc_blk

    # ---- K blocking: keep the weight resident whenever it fits -----------
    if k <= 2048:
        tk = _round_up(k, 16)                 # bf16 sublane packing (16 rows)
        k_pad = tk
        num_k = 1                             # weight fetched once, resident
    else:
        # TODO(synk): for huge K*OC, DMA the full weight into VMEM scratch
        # once (pl.ANY + make_async_copy) instead of re-fetching per M tile.
        num_k = _cdiv(k, 512)
        tk = _round_up(_cdiv(k, num_k), 128)
        k_pad = tk * num_k

    # ---- M tiling: biggest tile that fits the chip's VMEM budget ---------
    out_bytes = jnp.dtype(out_dtype).itemsize

    def _tile_vmem_bytes(tm):
        return (tm * tk * 2 * 2                      # patches, double-buffered
                + tk * oc_blk * 2 * 2                # weight
                + oc_blk * 4 * 2                     # bias
                + tm * oc_blk * out_bytes * 2        # output
                + (tm * oc_blk * 4 if num_k > 1 else 0))   # f32 accumulator

    tile_m = min(_round_up(m, 128), max(128, (max_tile_m // 128) * 128))
    while tile_m > 128 and _tile_vmem_bytes(tile_m) > vmem_budget:
        tile_m -= 128
    # Split M across TensorCores only on multi-TC chips (v7x); on single-TC
    # v5e/v6e shrinking tile_m only adds per-grid-step overhead.
    if num_cores >= 2:
        while tile_m > 128 and _cdiv(m, tile_m) * num_oc < num_cores:
            tile_m = max(128, _round_up(tile_m // 2, 128))
    m_pad = _round_up(m, tile_m)

    # ---- pad operands -----------------------------------------------------
    patches = jnp.pad(patches, ((0, m_pad - m), (0, k_pad - k)))
    w_mat = jnp.pad(w_mat, ((0, k_pad - k),
                            (0, oc_pad - c_out))).astype(jnp.bfloat16)
    bias2d = jnp.pad(bias, (0, oc_pad - c_out)).reshape(1, oc_pad)
    bias2d = bias2d.astype(jnp.float32)

    cost = pl.CostEstimate(
        flops=2 * m_pad * k_pad * oc_pad,
        transcendentals=0,
        bytes_accessed=(m_pad * k_pad * 2 + k_pad * oc_pad * 2
                        + oc_pad * 4 + m_pad * oc_pad * out_bytes),
    )

    # Grid order: OC outermost so the weight block index (kk, oc) is constant
    # across all M tiles of one OC block (resident weight when num_k == 1);
    # the K reduction axis is innermost ("arbitrary").
    grid = (num_oc, m_pad // tile_m, num_k)
    in_specs = [
        pl.BlockSpec((tile_m, tk), lambda oc, i, kk: (i, kk)),    # patches
        pl.BlockSpec((tk, oc_blk), lambda oc, i, kk: (kk, oc)),   # weight
        pl.BlockSpec((1, oc_blk), lambda oc, i, kk: (0, oc)),     # bias
    ]
    out_spec = pl.BlockSpec((tile_m, oc_blk), lambda oc, i, kk: (i, oc))

    if num_k == 1:
        kernel = _cbr_kernel_resident_w
        scratch = []
    else:
        kernel = _cbr_kernel_multi_k
        scratch = [pltpu.VMEM((tile_m, oc_blk), jnp.float32)]

    out_flat = pl.pallas_call(
        kernel,
        out_shape=jax.ShapeDtypeStruct((m_pad, oc_pad), out_dtype),
        grid_spec=pltpu.PrefetchScalarGridSpec(
            num_scalar_prefetch=0,
            grid=grid,
            in_specs=in_specs,
            out_specs=out_spec,
            scratch_shapes=scratch,
        ),
        compiler_params=pltpu.CompilerParams(
            dimension_semantics=("parallel", "parallel", "arbitrary"),
            vmem_limit_bytes=int(vmem_budget)),
        cost_estimate=cost,
    )(patches, w_mat, bias2d)

    out = out_flat[:m, :c_out].reshape(n, h_out, w_out, c_out)     # NHWC
    if not nchw_output:
        return out
    # One memory-bound transpose pass to honor the PyTorch NCHW contract.
    return jnp.transpose(out, (0, 3, 1, 2))                        # -> NCHW


# --------------------------------------------------------------------------
# Reference & self-test
# --------------------------------------------------------------------------
def _reference_cbr(x, conv_w, conv_b, gamma, beta, mean, var, eps=1e-5,
                   stride=1, padding=1, dilation=1):
    y = jax.lax.conv_general_dilated(
        x, conv_w, window_strides=(stride, stride),
        padding=[(padding, padding), (padding, padding)],
        rhs_dilation=(dilation, dilation),
        dimension_numbers=("NCHW", "OIHW", "NCHW"))
    y = y + conv_b[None, :, None, None]
    y = (y - mean[None, :, None, None]) / jnp.sqrt(var[None, :, None, None] + eps)
    y = y * gamma[None, :, None, None] + beta[None, :, None, None]
    return jnp.maximum(y, 0.0)


if __name__ == "__main__":
    key = jax.random.PRNGKey(0)
    k_x, k_w, k_b, k_g, k_bt, k_m, k_v = jax.random.split(key, 7)

    N, C_IN, H, W = 2, 4, 16, 16
    C_OUT, KS = 8, 3

    x = jax.random.normal(k_x, (N, C_IN, H, W), dtype=jnp.float32)
    conv_w = jax.random.normal(k_w, (C_OUT, C_IN, KS, KS), dtype=jnp.float32) * 0.1
    conv_b = jax.random.normal(k_b, (C_OUT,), dtype=jnp.float32) * 0.1
    gamma = 1.0 + 0.1 * jax.random.normal(k_g, (C_OUT,), dtype=jnp.float32)
    beta = 0.1 * jax.random.normal(k_bt, (C_OUT,), dtype=jnp.float32)
    running_mean = 0.1 * jax.random.normal(k_m, (C_OUT,), dtype=jnp.float32)
    running_var = jnp.abs(1.0 + 0.1 * jax.random.normal(k_v, (C_OUT,), dtype=jnp.float32))

    out = cbr_forward(x, conv_w, conv_b, gamma, beta, running_mean, running_var,
                      kernel_size=KS, stride=1, padding=1, dilation=1)
    out = jax.block_until_ready(out)

    ref = _reference_cbr(x, conv_w, conv_b, gamma, beta, running_mean, running_var)
    assert out.shape == (N, C_OUT, H, W), out.shape
    # bf16 MXU inputs -> looser tolerance vs. the f32 XLA reference.
    assert jnp.allclose(out, ref, atol=3e-2, rtol=3e-2), \
        float(jnp.max(jnp.abs(out - ref)))

    print("KERNEL_OK")
</pallas_src>

<mosaic_0001>
module attributes {stable_mosaic.version = 11 : i64} {
  func.func @_cbr_kernel_resident_w(%arg0: i32, %arg1: i32, %arg2: i32, %arg3: memref<512x48xbf16, #tpu.memory_space<vmem>>, %arg4: memref<48x128xbf16, #tpu.memory_space<vmem>>, %arg5: memref<1x128xf32, #tpu.memory_space<vmem>>, %arg6: memref<512x128xf32, #tpu.memory_space<vmem>>) attributes {dimension_semantics = [#tpu.dimension_semantics<parallel>, #tpu.dimension_semantics<parallel>, #tpu.dimension_semantics<arbitrary>], iteration_bounds = array<i64: 1, 1, 1>, scalar_prefetch = 0 : i64, scratch_operands = 0 : i64, tpu.core_type = #tpu.core_type<tc>, window_params = [{transform_indices = @transform_0, window_bounds = array<i64: 512, 48>}, {transform_indices = @transform_1, window_bounds = array<i64: 48, 128>}, {transform_indices = @transform_2, window_bounds = array<i64: 1, 128>}, {transform_indices = @transform_3, window_bounds = array<i64: 512, 128>}]} {
    %c0 = arith.constant 0 : index
    %c0_0 = arith.constant 0 : index
    %0 = vector.load %arg3[%c0, %c0_0] : memref<512x48xbf16, #tpu.memory_space<vmem>>, vector<512x48xbf16>
    %c0_1 = arith.constant 0 : index
    %c0_2 = arith.constant 0 : index
    %1 = vector.load %arg4[%c0_1, %c0_2] : memref<48x128xbf16, #tpu.memory_space<vmem>>, vector<48x128xbf16>
    %cst = arith.constant dense<0.000000e+00> : vector<512x128xf32>
    %2 = tpu.matmul %0, %1, %cst {dimension_numbers = #tpu.dot_dimension_numbers<[1], [0], [0], [1], [0, 0, 1, 1], [], []>} : vector<512x48xbf16>, vector<48x128xbf16>, vector<512x128xf32> -> vector<512x128xf32>
    %c0_3 = arith.constant 0 : index
    %c0_4 = arith.constant 0 : index
    %3 = vector.load %arg5[%c0_3, %c0_4] : memref<1x128xf32, #tpu.memory_space<vmem>>, vector<1x128xf32>
    %4 = vector.broadcast %3 : vector<1x128xf32> to vector<512x128xf32>
    %5 = arith.addf %2, %4 : vector<512x128xf32>
    %cst_5 = arith.constant 0.000000e+00 : f32
    %6 = vector.broadcast %cst_5 : f32 to vector<512x128xf32>
    %7 = arith.maximumf %5, %6 : vector<512x128xf32>
    %c0_6 = arith.constant 0 : index
    %c0_7 = arith.constant 0 : index
    %8 = vector.load %arg6[%c0_6, %c0_7] : memref<512x128xf32, #tpu.memory_space<vmem>>, vector<512x128xf32>
    tpu.vector_store %arg6[%c0_6, %c0_7], %7 {strides = array<i32>} : memref<512x128xf32, #tpu.memory_space<vmem>>, vector<512x128xf32>,
    return
  }
  func.func @transform_0(%arg0: i32, %arg1: i32, %arg2: i32) -> (i32, i32) {
    %c0_i32 = arith.constant 0 : i32
    return %arg1, %arg2 : i32, i32
  }
  func.func @transform_1(%arg0: i32, %arg1: i32, %arg2: i32) -> (i32, i32) {
    %c0_i32 = arith.constant 0 : i32
    return %arg2, %arg0 : i32, i32
  }
  func.func @transform_2(%arg0: i32, %arg1: i32, %arg2: i32) -> (i32, i32) {
    %c0_i32 = arith.constant 0 : i32
    %c0_i32_0 = arith.constant 0 : i32
    return %c0_i32, %arg0 : i32, i32
  }
  func.func @transform_3(%arg0: i32, %arg1: i32, %arg2: i32) -> (i32, i32) {
    %c0_i32 = arith.constant 0 : i32
    return %arg1, %arg0 : i32, i32
  }
}

</mosaic_0001>

<llo_original>
// kernel: cbr_forward.1
$region0: #{cbr_forward.1}
  #allocation0 [shape = 'u32[]', space=smem, size = 0x4, offset = 0x4, fixed_abs, tag = 'smem constant byte address 0x4 - core index']
  #allocation1 [shape = 'u32[144,128]{1,0:T(1,128)}', space=vmem, size = 0x12000, scoped, tag = 'internal scratch']
  %s0 = inlined_call_operand.vmem [shape: bf16[512,48], index: 0, kind: input, shape index: {}]
  %s1 = inlined_call_operand.vmem [shape: bf16[48,128], index: 1, kind: input, shape index: {}]
  %s2 = inlined_call_operand.vmem [shape: f32[1,128], index: 2, kind: input, shape index: {}]
  %s3 = inlined_call_operand.vmem [shape: f32[512,128], index: 3, kind: output, shape index: {}]
  %s4 = sld [smem:[#allocation0]]
  $region22: #{cbr_forward.1} parent=0
    _
  %s6 = ssub.s32 1, %s4
  %s7 = scalar_select 0, %s6, %s4
  // Predicated region
  $region2: #{cbr_forward.1} parent=0 // pred_check
    _
  $region3: #{cbr_forward.1} parent=0 // pred_check_branch
    %9 = sbr.rel (0) target = $region5
  $region4: #{cbr_forward.1} parent=0 // pred_region
    _
  $region5: #{cbr_forward.1} parent=0 // pred_fallthru
    _
  // Predicated region
  $region6: #{cbr_forward.1} parent=0 // pred_check
    _
  $region7: #{cbr_forward.1} parent=0 // pred_check_branch
    %11 = sbr.rel (0) target = $region9
  $region8: #{cbr_forward.1} parent=0 // pred_region
    _
  $region9: #{cbr_forward.1} parent=0 // pred_fallthru
    _
  // Predicated region
  $region10: #{cbr_forward.1} parent=0 // pred_check
    _
  $region11: #{cbr_forward.1} parent=0 // pred_check_branch
    %13 = sbr.rel (0) target = $region13
  $region12: #{cbr_forward.1} parent=0 // pred_region
    _
  $region13: #{cbr_forward.1} parent=0 // pred_fallthru
    _
  %v15 = vld [vmem:[%s0] sm:$0xf]
  %v16 = vld [vmem:[%s0 + $0x4] sm:$0xf]
  %v17 = vld [vmem:[%s0 + $0x8] sm:$0xf]
  %v18 = vld [vmem:[%s0 + $0xc] sm:$0xf]
  %v19 = vld [vmem:[%s0 + $0x10] sm:$0xf]
  %v20 = vld [vmem:[%s0 + $0x14] sm:$0xf]
  %v21 = vld [vmem:[%s0 + $0x18] sm:$0xf]
  %v22 = vld [vmem:[%s0 + $0x1c] sm:$0xf]
  %v23 = vld [vmem:[%s0 + $0x20] sm:$0xf]
  %v24 = vld [vmem:[%s0 + $0x24] sm:$0xf]
  %v25 = vld [vmem:[%s0 + $0x28] sm:$0xf]
  %v26 = vld [vmem:[%s0 + $0x2c] sm:$0xf]
  %v27 = vld [vmem:[%s0 + $0x30] sm:$0xf]
  %v28 = vld [vmem:[%s0 + $0x34] sm:$0xf]
  %v29 = vld [vmem:[%s0 + $0x38] sm:$0xf]
  %v30 = vld [vmem:[%s0 + $0x3c] sm:$0xf]
  %v31 = vld [vmem:[%s0 + $0x40] sm:$0xf]
  %v32 = vld [vmem:[%s0 + $0x44] sm:$0xf]
  %v33 = vld [vmem:[%s0 + $0x48] sm:$0xf]
  %v34 = vld [vmem:[%s0 + $0x4c] sm:$0xf]
  %v35 = vld [vmem:[%s0 + $0x50] sm:$0xf]
  %v36 = vld [vmem:[%s0 + $0x54] sm:$0xf]
  %v37 = vld [vmem:[%s0 + $0x58] sm:$0xf]
  %v38 = vld [vmem:[%s0 + $0x5c] sm:$0xf]
  %v39 = vld [vmem:[%s0 + $0x60] sm:$0xf]
  %v40 = vld [vmem:[%s0 + $0x64] sm:$0xf]
  %v41 = vld [vmem:[%s0 + $0x68] sm:$0xf]
  %v42 = vld [vmem:[%s0 + $0x6c] sm:$0xf]
  %v43 = vld [vmem:[%s0 + $0x70] sm:$0xf]
  %v44 = vld [vmem:[%s0 + $0x74] sm:$0xf]
  %v45 = vld [vmem:[%s0 + $0x78] sm:$0xf]
  %v46 = vld [vmem:[%s0 + $0x7c] sm:$0xf]
  %v47 = vld [vmem:[%s0 + $0x80] sm:$0xf]
  %v48 = vld [vmem:[%s0 + $0x84] sm:$0xf]
  %v49 = vld [vmem:[%s0 + $0x88] sm:$0xf]
  %v50 = vld [vmem:[%s0 + $0x8c] sm:$0xf]
  %v51 = vld [vmem:[%s0 + $0x90] sm:$0xf]
  %v52 = vld [vmem:[%s0 + $0x94] sm:$0xf]
  %v53 = vld [vmem:[%s0 + $0x98] sm:$0xf]
  %v54 = vld [vmem:[%s0 + $0x9c] sm:$0xf]
  %v55 = vld [vmem:[%s0 + $0xa0] sm:$0xf]
  %v56 = vld [vmem:[%s0 + $0xa4] sm:$0xf]
  %v57 = vld [vmem:[%s0 + $0xa8] sm:$0xf]
  %v58 = vld [vmem:[%s0 + $0xac] sm:$0xf]
  %v59 = vld [vmem:[%s0 + $0xb0] sm:$0xf]
  %v60 = vld [vmem:[%s0 + $0xb4] sm:$0xf]
  %v61 = vld [vmem:[%s0 + $0xb8] sm:$0xf]
  %v62 = vld [vmem:[%s0 + $0xbc] sm:$0xf]
  %v63 = vld [vmem:[%s0 + $0xc0] sm:$0xf]
  %v64 = vld [vmem:[%s0 + $0xc4] sm:$0xf]
  %v65 = vld [vmem:[%s0 + $0xc8] sm:$0xf]
  %v66 = vld [vmem:[%s0 + $0xcc] sm:$0xf]
  %v67 = vld [vmem:[%s0 + $0xd0] sm:$0xf]
  %v68 = vld [vmem:[%s0 + $0xd4] sm:$0xf]
  %v69 = vld [vmem:[%s0 + $0xd8] sm:$0xf]
  %v70 = vld [vmem:[%s0 + $0xdc] sm:$0xf]
  %v71 = vld [vmem:[%s0 + $0xe0] sm:$0xf]
  %v72 = vld [vmem:[%s0 + $0xe4] sm:$0xf]
  %v73 = vld [vmem:[%s0 + $0xe8] sm:$0xf]
  %v74 = vld [vmem:[%s0 + $0xec] sm:$0xf]
  %v75 = vld [vmem:[%s0 + $0xf0] sm:$0xf]
  %v76 = vld [vmem:[%s0 + $0xf4] sm:$0xf]
  %v77 = vld [vmem:[%s0 + $0xf8] sm:$0xf]
  %v78 = vld [vmem:[%s0 + $0xfc] sm:$0xf]
  %v79 = vld [vmem:[%s1] sm:$0xf]
  %v80 = vld [vmem:[%s1 + $0x4] sm:$0xf]
  %v81 = vld [vmem:[%s1 + $0x8] sm:$0xf]
  %v82 = vld [vmem:[%s1 + $0xc] sm:$0xf]
  %v83 = vld [vmem:[%s1 + $0x10] sm:$0xf]
  %v84 = vld [vmem:[%s1 + $0x14] sm:$0xf]
  %v85 = vld [vmem:[%s2] sm:$0x1]
  %v87 = vlaneseq
  %v88 = vshrl.u32 %v87, 7
  %v89 = vsub.s32 0, %v88
  %v90 = vrot.slane %v85, %v89
  %v156 = vunpack.c.l.b16 %v15
  %v157 = vunpack.c.l.b16 %v16
  %v158 = vunpack.c.l.b16 %v17
  %v159 = vunpack.c.l.b16 %v18
  %v160 = vunpack.c.l.b16 %v19
  %v161 = vunpack.c.l.b16 %v20
  %v162 = vunpack.c.l.b16 %v21
  %v163 = vunpack.c.l.b16 %v22
  %v164 = vunpack.c.l.b16 %v23
  %v165 = vunpack.c.l.b16 %v24
  %v166 = vunpack.c.l.b16 %v25
  %v167 = vunpack.c.l.b16 %v26
  %v168 = vunpack.c.l.b16 %v27
  %v169 = vunpack.c.l.b16 %v28
  %v170 = vunpack.c.l.b16 %v29
  %v171 = vunpack.c.l.b16 %v30
  %v172 = vunpack.c.l.b16 %v31
  %v173 = vunpack.c.l.b16 %v32
  %v174 = vunpack.c.l.b16 %v33
  %v175 = vunpack.c.l.b16 %v34
  %v176 = vunpack.c.l.b16 %v35
  %v177 = vunpack.c.l.b16 %v36
  %v178 = vunpack.c.l.b16 %v37
  %v179 = vunpack.c.l.b16 %v38
  %v180 = vunpack.c.l.b16 %v39
  %v181 = vunpack.c.l.b16 %v40
  %v182 = vunpack.c.l.b16 %v41
  %v183 = vunpack.c.l.b16 %v42
  %v184 = vunpack.c.l.b16 %v43
  %v185 = vunpack.c.l.b16 %v44
  %v186 = vunpack.c.l.b16 %v45
  %v187 = vunpack.c.l.b16 %v46
  %v188 = vunpack.c.l.b16 %v47
  %v189 = vunpack.c.l.b16 %v48
  %v190 = vunpack.c.l.b16 %v49
  %v191 = vunpack.c.l.b16 %v50
  %v192 = vunpack.c.l.b16 %v51
  %v193 = vunpack.c.l.b16 %v52
  %v194 = vunpack.c.l.b16 %v53
  %v195 = vunpack.c.l.b16 %v54
  %v196 = vunpack.c.l.b16 %v55
  %v197 = vunpack.c.l.b16 %v56
  %v198 = vunpack.c.l.b16 %v57
  %v199 = vunpack.c.l.b16 %v58
  %v200 = vunpack.c.l.b16 %v59
  %v201 = vunpack.c.l.b16 %v60
  %v202 = vunpack.c.l.b16 %v61
  %v203 = vunpack.c.l.b16 %v62
  %v204 = vunpack.c.l.b16 %v63
  %v205 = vunpack.c.l.b16 %v64
  %v206 = vunpack.c.l.b16 %v65
  %v207 = vunpack.c.l.b16 %v66
  %v208 = vunpack.c.l.b16 %v67
  %v209 = vunpack.c.l.b16 %v68
  %v210 = vunpack.c.l.b16 %v69
  %v211 = vunpack.c.l.b16 %v70
  %v212 = vunpack.c.l.b16 %v71
  %v213 = vunpack.c.l.b16 %v72
  %v214 = vunpack.c.l.b16 %v73
  %v215 = vunpack.c.l.b16 %v74
  %v216 = vunpack.c.l.b16 %v75
  %v217 = vunpack.c.l.b16 %v76
  %v218 = vunpack.c.l.b16 %v77
  %v219 = vunpack.c.l.b16 %v78
  %v220 = vpack.c.b16 %v157, %v156
  %v221 = vpack.c.b16 %v159, %v158
  %v222 = vpack.c.b16 %v161, %v160
  %v223 = vpack.c.b16 %v163, %v162
  %v224 = vpack.c.b16 %v165, %v164
  %v225 = vpack.c.b16 %v167, %v166
  %v226 = vpack.c.b16 %v169, %v168
  %v227 = vpack.c.b16 %v171, %v170
  %v228 = vpack.c.b16 %v173, %v172
  %v229 = vpack.c.b16 %v175, %v174
  %v230 = vpack.c.b16 %v177, %v176
  %v231 = vpack.c.b16 %v179, %v178
  %v232 = vpack.c.b16 %v181, %v180
  %v233 = vpack.c.b16 %v183, %v182
  %v234 = vpack.c.b16 %v185, %v184
  %v235 = vpack.c.b16 %v187, %v186
  %v236 = vpack.c.b16 %v189, %v188
  %v237 = vpack.c.b16 %v191, %v190
  %v238 = vpack.c.b16 %v193, %v192
  %v239 = vpack.c.b16 %v195, %v194
  %v240 = vpack.c.b16 %v197, %v196
  %v241 = vpack.c.b16 %v199, %v198
  %v242 = vpack.c.b16 %v201, %v200
  %v243 = vpack.c.b16 %v203, %v202
  %v244 = vpack.c.b16 %v205, %v204
  %v245 = vpack.c.b16 %v207, %v206
  %v246 = vpack.c.b16 %v209, %v208
  %v247 = vpack.c.b16 %v211, %v210
  %v248 = vpack.c.b16 %v213, %v212
  %v249 = vpack.c.b16 %v215, %v214
  %v250 = vpack.c.b16 %v217, %v216
  %v251 = vpack.c.b16 %v219, %v218
  %v258 = vunpack.c.l.b16 %v79
  %v259 = vunpack.c.l.b16 %v80
  %v260 = vunpack.c.l.b16 %v81
  %v261 = vunpack.c.l.b16 %v82
  %v262 = vunpack.c.l.b16 %v83
  %v263 = vunpack.c.l.b16 %v84
  %v264 = vpack.c.b16 %v259, %v258
  %v265 = vpack.c.b16 %v261, %v260
  %v266 = vpack.c.b16 %v263, %v262
  %vm270 = vcmask 392192
  %v272 = vsel %vm270, %v220, 0
  %v275 = vsel %vm270, %v221, 0
  %v278 = vsel %vm270, %v222, 0
  %v281 = vsel %vm270, %v223, 0
  %v284 = vsel %vm270, %v224, 0
  %v287 = vsel %vm270, %v225, 0
  %v290 = vsel %vm270, %v226, 0
  %v293 = vsel %vm270, %v227, 0
  %v296 = vsel %vm270, %v228, 0
  %v299 = vsel %vm270, %v229, 0
  %v302 = vsel %vm270, %v230, 0
  %v305 = vsel %vm270, %v231, 0
  %v308 = vsel %vm270, %v232, 0
  %v311 = vsel %vm270, %v233, 0
  %v314 = vsel %vm270, %v234, 0
  %v317 = vsel %vm270, %v235, 0
  %v320 = vsel %vm270, %v236, 0
  %v323 = vsel %vm270, %v237, 0
  %v326 = vsel %vm270, %v238, 0
  %v329 = vsel %vm270, %v239, 0
  %v332 = vsel %vm270, %v240, 0
  %v335 = vsel %vm270, %v241, 0
  %v338 = vsel %vm270, %v242, 0
  %v341 = vsel %vm270, %v243, 0
  %v344 = vsel %vm270, %v244, 0
  %v347 = vsel %vm270, %v245, 0
  %v350 = vsel %vm270, %v246, 0
  %v353 = vsel %vm270, %v247, 0
  %v356 = vsel %vm270, %v248, 0
  %v359 = vsel %vm270, %v249, 0
  %v362 = vsel %vm270, %v250, 0
  %v365 = vsel %vm270, %v251, 0
  %367 = vmatprep.subr.bf16.mxu0 0
  %368 = vmatpush1.bf16.msra.mxu0 0
  %369 = vmatprep.subr.bf16.mxu0 0
  %370 = vmatpush1.bf16.msra.mxu0 0
  %371 = vmatprep.subr.bf16.mxu0 0
  %372 = vmatpush1.bf16.msra.mxu0 0
  %373 = vmatprep.subr.bf16.mxu0 0
  %374 = vmatpush1.bf16.msra.mxu0 0
  %375 = vmatprep.subr.bf16.mxu0 0
  %376 = vmatpush1.bf16.msra.mxu0 0
  %377 = vmatprep.subr.bf16.mxu0 0
  %378 = vmatpush1.bf16.msra.mxu0 %v266
  %379 = vmatprep.subr.bf16.mxu0 0
  %380 = vmatpush1.bf16.msra.mxu0 %v265
  %381 = vmatprep.subr.bf16.mxu0 0
  %382 = vmatpush1.bf16.msra.mxu0 %v264
  %383 = vmatprep.subr.bf16.mxu0 0
  %384 = vmatpush2.bf16.msra.mxu0 0
  %385 = vmatprep.subr.bf16.mxu0 0
  %386 = vmatpush2.bf16.msra.mxu0 0
  %387 = vmatprep.subr.bf16.mxu0 0
  %388 = vmatpush2.bf16.msra.mxu0 0
  %389 = vmatprep.subr.bf16.mxu0 0
  %390 = vmatpush2.bf16.msra.mxu0 0
  %391 = vmatprep.subr.bf16.mxu0 0
  %392 = vmatpush2.bf16.msra.mxu0 0
  %393 = vmatprep.subr.bf16.mxu0 0
  %394 = vmatpush2.bf16.msra.mxu0 0
  %395 = vmatprep.subr.bf16.mxu0 0
  %396 = vmatpush2.bf16.msra.mxu0 0
  %397 = vmatprep.subr.bf16.mxu0 0
  %398 = vmatpush2.bf16.msra.mxu0 0
  %399 = vmatprep.mubr.bf16.mxu0 0
  %400 = vmatmul.mubr.bf16.gmra.mxu0 %v272
  %v401 = vpop.f32.mrf.mxu0
  %v402 = vadd.f32 %v90, %v401
  %v403 = vpop.f32.mrf.mxu0
  %v404 = vpop.f32.mrf.mxu0
  %v405 = vadd.f32 %v90, %v404
  %v406 = vpop.f32.mrf.mxu0
  %407 = vmatprep.mubr.bf16.mxu0 0
  %408 = vmatmul.mubr.bf16.gmra.mxu0 %v275
  %v409 = vpop.f32.mrf.mxu0
  %v410 = vadd.f32 %v90, %v409
  %v411 = vpop.f32.mrf.mxu0
  %v412 = vpop.f32.mrf.mxu0
  %v413 = vadd.f32 %v90, %v412
  %v414 = vpop.f32.mrf.mxu0
  %415 = vmatprep.mubr.bf16.mxu0 0
  %416 = vmatmul.mubr.bf16.gmra.mxu0 %v278
  %v417 = vpop.f32.mrf.mxu0
  %v418 = vadd.f32 %v90, %v417
  %v419 = vpop.f32.mrf.mxu0
  %v420 = vpop.f32.mrf.mxu0
  %v421 = vadd.f32 %v90, %v420
  %v422 = vpop.f32.mrf.mxu0
  %423 = vmatprep.mubr.bf16.mxu0 0
  %424 = vmatmul.mubr.bf16.gmra.mxu0 %v281
  %v425 = vpop.f32.mrf.mxu0
  %v426 = vadd.f32 %v90, %v425
  %v427 = vpop.f32.mrf.mxu0
  %v428 = vpop.f32.mrf.mxu0
  %v429 = vadd.f32 %v90, %v428
  %v430 = vpop.f32.mrf.mxu0
  %431 = vmatprep.mubr.bf16.mxu0 0
  %432 = vmatmul.mubr.bf16.gmra.mxu0 %v284
  %v433 = vpop.f32.mrf.mxu0
  %v434 = vadd.f32 %v90, %v433
  %v435 = vpop.f32.mrf.mxu0
  %v436 = vpop.f32.mrf.mxu0
  %v437 = vadd.f32 %v90, %v436
  %v438 = vpop.f32.mrf.mxu0
  %439 = vmatprep.mubr.bf16.mxu0 0
  %440 = vmatmul.mubr.bf16.gmra.mxu0 %v287
  %v441 = vpop.f32.mrf.mxu0
  %v442 = vadd.f32 %v90, %v441
  %v443 = vpop.f32.mrf.mxu0
  %v444 = vpop.f32.mrf.mxu0
  %v445 = vadd.f32 %v90, %v444
  %v446 = vpop.f32.mrf.mxu0
  %447 = vmatprep.mubr.bf16.mxu0 0
  %448 = vmatmul.mubr.bf16.gmra.mxu0 %v290
  %v449 = vpop.f32.mrf.mxu0
  %v450 = vadd.f32 %v90, %v449
  %v451 = vpop.f32.mrf.mxu0
  %v452 = vpop.f32.mrf.mxu0
  %v453 = vadd.f32 %v90, %v452
  %v454 = vpop.f32.mrf.mxu0
  %455 = vmatprep.mubr.bf16.mxu0 0
  %456 = vmatmul.mubr.bf16.gmra.mxu0 %v293
  %v457 = vpop.f32.mrf.mxu0
  %v458 = vadd.f32 %v90, %v457
  %v459 = vpop.f32.mrf.mxu0
  %v460 = vpop.f32.mrf.mxu0
  %v461 = vadd.f32 %v90, %v460
  %v462 = vpop.f32.mrf.mxu0
  %463 = vmatprep.mubr.bf16.mxu0 0
  %464 = vmatmul.mubr.bf16.gmra.mxu0 %v296
  %v465 = vpop.f32.mrf.mxu0
  %v466 = vadd.f32 %v90, %v465
  %v467 = vpop.f32.mrf.mxu0
  %v468 = vpop.f32.mrf.mxu0
  %v469 = vadd.f32 %v90, %v468
  %v470 = vpop.f32.mrf.mxu0
  %471 = vmatprep.mubr.bf16.mxu0 0
  %472 = vmatmul.mubr.bf16.gmra.mxu0 %v299
  %v473 = vpop.f32.mrf.mxu0
  %v474 = vadd.f32 %v90, %v473
  %v475 = vpop.f32.mrf.mxu0
  %v476 = vpop.f32.mrf.mxu0
  %v477 = vadd.f32 %v90, %v476
  %v478 = vpop.f32.mrf.mxu0
  %479 = vmatprep.mubr.bf16.mxu0 0
  %480 = vmatmul.mubr.bf16.gmra.mxu0 %v302
  %v481 = vpop.f32.mrf.mxu0
  %v482 = vadd.f32 %v90, %v481
  %v483 = vpop.f32.mrf.mxu0
  %v484 = vpop.f32.mrf.mxu0
  %v485 = vadd.f32 %v90, %v484
  %v486 = vpop.f32.mrf.mxu0
  %487 = vmatprep.mubr.bf16.mxu0 0
  %488 = vmatmul.mubr.bf16.gmra.mxu0 %v305
  %v489 = vpop.f32.mrf.mxu0
  %v490 = vadd.f32 %v90, %v489
  %v491 = vpop.f32.mrf.mxu0
  %v492 = vpop.f32.mrf.mxu0
  %v493 = vadd.f32 %v90, %v492
  %v494 = vpop.f32.mrf.mxu0
  %495 = vmatprep.mubr.bf16.mxu0 0
  %496 = vmatmul.mubr.bf16.gmra.mxu0 %v308
  %v497 = vpop.f32.mrf.mxu0
  %v498 = vadd.f32 %v90, %v497
  %v499 = vpop.f32.mrf.mxu0
  %v500 = vpop.f32.mrf.mxu0
  %v501 = vadd.f32 %v90, %v500
  %v502 = vpop.f32.mrf.mxu0
  %503 = vmatprep.mubr.bf16.mxu0 0
  %504 = vmatmul.mubr.bf16.gmra.mxu0 %v311
  %v505 = vpop.f32.mrf.mxu0
  %v506 = vadd.f32 %v90, %v505
  %v507 = vpop.f32.mrf.mxu0
  %v508 = vpop.f32.mrf.mxu0
  %v509 = vadd.f32 %v90, %v508
  %v510 = vpop.f32.mrf.mxu0
  %511 = vmatprep.mubr.bf16.mxu0 0
  %512 = vmatmul.mubr.bf16.gmra.mxu0 %v314
  %v513 = vpop.f32.mrf.mxu0
  %v514 = vadd.f32 %v90, %v513
  %v515 = vpop.f32.mrf.mxu0
  %v516 = vpop.f32.mrf.mxu0
  %v517 = vadd.f32 %v90, %v516
  %v518 = vpop.f32.mrf.mxu0
  %519 = vmatprep.mubr.bf16.mxu0 0
  %520 = vmatmul.mubr.bf16.gmra.mxu0 %v317
  %v521 = vpop.f32.mrf.mxu0
  %v522 = vadd.f32 %v90, %v521
  %v523 = vpop.f32.mrf.mxu0
  %v524 = vpop.f32.mrf.mxu0
  %v525 = vadd.f32 %v90, %v524
  %v526 = vpop.f32.mrf.mxu0
  %527 = vmatprep.mubr.bf16.mxu0 0
  %528 = vmatmul.mubr.bf16.gmra.mxu0 %v320
  %v529 = vpop.f32.mrf.mxu0
  %v530 = vadd.f32 %v90, %v529
  %v531 = vpop.f32.mrf.mxu0
  %v532 = vpop.f32.mrf.mxu0
  %v533 = vadd.f32 %v90, %v532
  %v534 = vpop.f32.mrf.mxu0
  %535 = vmatprep.mubr.bf16.mxu0 0
  %536 = vmatmul.mubr.bf16.gmra.mxu0 %v323
  %v537 = vpop.f32.mrf.mxu0
  %v538 = vadd.f32 %v90, %v537
  %v539 = vpop.f32.mrf.mxu0
  %v540 = vpop.f32.mrf.mxu0
  %v541 = vadd.f32 %v90, %v540
  %v542 = vpop.f32.mrf.mxu0
  %543 = vmatprep.mubr.bf16.mxu0 0
  %544 = vmatmul.mubr.bf16.gmra.mxu0 %v326
  %v545 = vpop.f32.mrf.mxu0
  %v546 = vadd.f32 %v90, %v545
  %v547 = vpop.f32.mrf.mxu0
  %v548 = vpop.f32.mrf.mxu0
  %v549 = vadd.f32 %v90, %v548
  %v550 = vpop.f32.mrf.mxu0
  %551 = vmatprep.mubr.bf16.mxu0 0
  %552 = vmatmul.mubr.bf16.gmra.mxu0 %v329
  %v553 = vpop.f32.mrf.mxu0
  %v554 = vadd.f32 %v90, %v553
  %v555 = vpop.f32.mrf.mxu0
  %v556 = vpop.f32.mrf.mxu0
  %v557 = vadd.f32 %v90, %v556
  %v558 = vpop.f32.mrf.mxu0
  %559 = vmatprep.mubr.bf16.mxu0 0
  %560 = vmatmul.mubr.bf16.gmra.mxu0 %v332
  %v561 = vpop.f32.mrf.mxu0
  %v562 = vadd.f32 %v90, %v561
  %v563 = vpop.f32.mrf.mxu0
  %v564 = vpop.f32.mrf.mxu0
  %v565 = vadd.f32 %v90, %v564
  %v566 = vpop.f32.mrf.mxu0
  %567 = vmatprep.mubr.bf16.mxu0 0
  %568 = vmatmul.mubr.bf16.gmra.mxu0 %v335
  %v569 = vpop.f32.mrf.mxu0
  %v570 = vadd.f32 %v90, %v569
  %v571 = vpop.f32.mrf.mxu0
  %v572 = vpop.f32.mrf.mxu0
  %v573 = vadd.f32 %v90, %v572
  %v574 = vpop.f32.mrf.mxu0
  %575 = vmatprep.mubr.bf16.mxu0 0
  %576 = vmatmul.mubr.bf16.gmra.mxu0 %v338
  %v577 = vpop.f32.mrf.mxu0
  %v578 = vadd.f32 %v90, %v577
  %v579 = vpop.f32.mrf.mxu0
  %v580 = vpop.f32.mrf.mxu0
  %v581 = vadd.f32 %v90, %v580
  %v582 = vpop.f32.mrf.mxu0
  %583 = vmatprep.mubr.bf16.mxu0 0
  %584 = vmatmul.mubr.bf16.gmra.mxu0 %v341
  %v585 = vpop.f32.mrf.mxu0
  %v586 = vadd.f32 %v90, %v585
  %v587 = vpop.f32.mrf.mxu0
  %v588 = vpop.f32.mrf.mxu0
  %v589 = vadd.f32 %v90, %v588
  %v590 = vpop.f32.mrf.mxu0
  %591 = vmatprep.mubr.bf16.mxu0 0
  %592 = vmatmul.mubr.bf16.gmra.mxu0 %v344
  %v593 = vpop.f32.mrf.mxu0
  %v594 = vadd.f32 %v90, %v593
  %v595 = vpop.f32.mrf.mxu0
  %v596 = vpop.f32.mrf.mxu0
  %v597 = vadd.f32 %v90, %v596
  %v598 = vpop.f32.mrf.mxu0
  %599 = vmatprep.mubr.bf16.mxu0 0
  %600 = vmatmul.mubr.bf16.gmra.mxu0 %v347
  %v601 = vpop.f32.mrf.mxu0
  %v602 = vadd.f32 %v90, %v601
  %v603 = vpop.f32.mrf.mxu0
  %v604 = vpop.f32.mrf.mxu0
  %v605 = vadd.f32 %v90, %v604
  %v606 = vpop.f32.mrf.mxu0
  %607 = vmatprep.mubr.bf16.mxu0 0
  %608 = vmatmul.mubr.bf16.gmra.mxu0 %v350
  %v609 = vpop.f32.mrf.mxu0
  %v610 = vadd.f32 %v90, %v609
  %v611 = vpop.f32.mrf.mxu0
  %v612 = vpop.f32.mrf.mxu0
  %v613 = vadd.f32 %v90, %v612
  %v614 = vpop.f32.mrf.mxu0
  %615 = vmatprep.mubr.bf16.mxu0 0
  %616 = vmatmul.mubr.bf16.gmra.mxu0 %v353
  %v617 = vpop.f32.mrf.mxu0
  %v618 = vadd.f32 %v90, %v617
  %v619 = vpop.f32.mrf.mxu0
  %v620 = vpop.f32.mrf.mxu0
  %v621 = vadd.f32 %v90, %v620
  %v622 = vpop.f32.mrf.mxu0
  %623 = vmatprep.mubr.bf16.mxu0 0
  %624 = vmatmul.mubr.bf16.gmra.mxu0 %v356
  %v625 = vpop.f32.mrf.mxu0
  %v626 = vadd.f32 %v90, %v625
  %v627 = vpop.f32.mrf.mxu0
  %v628 = vpop.f32.mrf.mxu0
  %v629 = vadd.f32 %v90, %v628
  %v630 = vpop.f32.mrf.mxu0
  %631 = vmatprep.mubr.bf16.mxu0 0
  %632 = vmatmul.mubr.bf16.gmra.mxu0 %v359
  %v633 = vpop.f32.mrf.mxu0
  %v634 = vadd.f32 %v90, %v633
  %v635 = vpop.f32.mrf.mxu0
  %v636 = vpop.f32.mrf.mxu0
  %v637 = vadd.f32 %v90, %v636
  %v638 = vpop.f32.mrf.mxu0
  %639 = vmatprep.mubr.bf16.mxu0 0
  %640 = vmatmul.mubr.bf16.gmra.mxu0 %v362
  %v641 = vpop.f32.mrf.mxu0
  %v642 = vadd.f32 %v90, %v641
  %v643 = vpop.f32.mrf.mxu0
  %v644 = vpop.f32.mrf.mxu0
  %v645 = vadd.f32 %v90, %v644
  %v646 = vpop.f32.mrf.mxu0
  %647 = vmatprep.mubr.bf16.mxu0 0
  %648 = vmatmul.mubr.bf16.gmra.mxu0 %v365
  %v649 = vpop.f32.mrf.mxu0
  %v650 = vadd.f32 %v90, %v649
  %v651 = vpop.f32.mrf.mxu0
  %v652 = vpop.f32.mrf.mxu0
  %v653 = vadd.f32 %v90, %v652
  %v654 = vpop.f32.mrf.mxu0
  %655 = vdwg.mxu0
  %v656 = vmax.f32 %v402, 0.0
  %v657 = vmax.f32 %v405, 0.0
  %v658 = vmax.f32 %v410, 0.0
  %v659 = vmax.f32 %v413, 0.0
  %v660 = vmax.f32 %v418, 0.0
  %v661 = vmax.f32 %v421, 0.0
  %v662 = vmax.f32 %v426, 0.0
  %v663 = vmax.f32 %v429, 0.0
  %v664 = vmax.f32 %v434, 0.0
  %v665 = vmax.f32 %v437, 0.0
  %v666 = vmax.f32 %v442, 0.0
  %v667 = vmax.f32 %v445, 0.0
  %v668 = vmax.f32 %v450, 0.0
  %v669 = vmax.f32 %v453, 0.0
  %v670 = vmax.f32 %v458, 0.0
  %v671 = vmax.f32 %v461, 0.0
  %v672 = vmax.f32 %v466, 0.0
  %v673 = vmax.f32 %v469, 0.0
  %v674 = vmax.f32 %v474, 0.0
  %v675 = vmax.f32 %v477, 0.0
  %v676 = vmax.f32 %v482, 0.0
  %v677 = vmax.f32 %v485, 0.0
  %v678 = vmax.f32 %v490, 0.0
  %v679 = vmax.f32 %v493, 0.0
  %v680 = vmax.f32 %v498, 0.0
  %v681 = vmax.f32 %v501, 0.0
  %v682 = vmax.f32 %v506, 0.0
  %v683 = vmax.f32 %v509, 0.0
  %v684 = vmax.f32 %v514, 0.0
  %v685 = vmax.f32 %v517, 0.0
  %v686 = vmax.f32 %v522, 0.0
  %v687 = vmax.f32 %v525, 0.0
  %v688 = vmax.f32 %v530, 0.0
  %v689 = vmax.f32 %v533, 0.0
  %v690 = vmax.f32 %v538, 0.0
  %v691 = vmax.f32 %v541, 0.0
  %v692 = vmax.f32 %v546, 0.0
  %v693 = vmax.f32 %v549, 0.0
  %v694 = vmax.f32 %v554, 0.0
  %v695 = vmax.f32 %v557, 0.0
  %v696 = vmax.f32 %v562, 0.0
  %v697 = vmax.f32 %v565, 0.0
  %v698 = vmax.f32 %v570, 0.0
  %v699 = vmax.f32 %v573, 0.0
  %v700 = vmax.f32 %v578, 0.0
  %v701 = vmax.f32 %v581, 0.0
  %v702 = vmax.f32 %v586, 0.0
  %v703 = vmax.f32 %v589, 0.0
  %v704 = vmax.f32 %v594, 0.0
  %v705 = vmax.f32 %v597, 0.0
  %v706 = vmax.f32 %v602, 0.0
  %v707 = vmax.f32 %v605, 0.0
  %v708 = vmax.f32 %v610, 0.0
  %v709 = vmax.f32 %v613, 0.0
  %v710 = vmax.f32 %v618, 0.0
  %v711 = vmax.f32 %v621, 0.0
  %v712 = vmax.f32 %v626, 0.0
  %v713 = vmax.f32 %v629, 0.0
  %v714 = vmax.f32 %v634, 0.0
  %v715 = vmax.f32 %v637, 0.0
  %v716 = vmax.f32 %v642, 0.0
  %v717 = vmax.f32 %v645, 0.0
  %v718 = vmax.f32 %v650, 0.0
  %v719 = vmax.f32 %v653, 0.0
  %720 = vst [vmem:[%s3] sm:$0xff] %v656
  %721 = vst [vmem:[%s3 + $0x8] sm:$0xff] %v657
  %722 = vst [vmem:[%s3 + $0x10] sm:$0xff] %v658
  %723 = vst [vmem:[%s3 + $0x18] sm:$0xff] %v659
  %724 = vst [vmem:[%s3 + $0x20] sm:$0xff] %v660
  %725 = vst [vmem:[%s3 + $0x28] sm:$0xff] %v661
  %726 = vst [vmem:[%s3 + $0x30] sm:$0xff] %v662
  %727 = vst [vmem:[%s3 + $0x38] sm:$0xff] %v663
  %728 = vst [vmem:[%s3 + $0x40] sm:$0xff] %v664
  %729 = vst [vmem:[%s3 + $0x48] sm:$0xff] %v665
  %730 = vst [vmem:[%s3 + $0x50] sm:$0xff] %v666
  %731 = vst [vmem:[%s3 + $0x58] sm:$0xff] %v667
  %732 = vst [vmem:[%s3 + $0x60] sm:$0xff] %v668
  %733 = vst [vmem:[%s3 + $0x68] sm:$0xff] %v669
  %734 = vst [vmem:[%s3 + $0x70] sm:$0xff] %v670
  %735 = vst [vmem:[%s3 + $0x78] sm:$0xff] %v671
  %736 = vst [vmem:[%s3 + $0x80] sm:$0xff] %v672
  %737 = vst [vmem:[%s3 + $0x88] sm:$0xff] %v673
  %738 = vst [vmem:[%s3 + $0x90] sm:$0xff] %v674
  %739 = vst [vmem:[%s3 + $0x98] sm:$0xff] %v675
  %740 = vst [vmem:[%s3 + $0xa0] sm:$0xff] %v676
  %741 = vst [vmem:[%s3 + $0xa8] sm:$0xff] %v677
  %742 = vst [vmem:[%s3 + $0xb0] sm:$0xff] %v678
  %743 = vst [vmem:[%s3 + $0xb8] sm:$0xff] %v679
  %744 = vst [vmem:[%s3 + $0xc0] sm:$0xff] %v680
  %745 = vst [vmem:[%s3 + $0xc8] sm:$0xff] %v681
  %746 = vst [vmem:[%s3 + $0xd0] sm:$0xff] %v682
  %747 = vst [vmem:[%s3 + $0xd8] sm:$0xff] %v683
  %748 = vst [vmem:[%s3 + $0xe0] sm:$0xff] %v684
  %749 = vst [vmem:[%s3 + $0xe8] sm:$0xff] %v685
  %750 = vst [vmem:[%s3 + $0xf0] sm:$0xff] %v686
  %751 = vst [vmem:[%s3 + $0xf8] sm:$0xff] %v687
  %752 = vst [vmem:[%s3 + $0x100] sm:$0xff] %v688
  %753 = vst [vmem:[%s3 + $0x108] sm:$0xff] %v689
  %754 = vst [vmem:[%s3 + $0x110] sm:$0xff] %v690
  %755 = vst [vmem:[%s3 + $0x118] sm:$0xff] %v691
  %756 = vst [vmem:[%s3 + $0x120] sm:$0xff] %v692
  %757 = vst [vmem:[%s3 + $0x128] sm:$0xff] %v693
  %758 = vst [vmem:[%s3 + $0x130] sm:$0xff] %v694
  %759 = vst [vmem:[%s3 + $0x138] sm:$0xff] %v695
  %760 = vst [vmem:[%s3 + $0x140] sm:$0xff] %v696
  %761 = vst [vmem:[%s3 + $0x148] sm:$0xff] %v697
  %762 = vst [vmem:[%s3 + $0x150] sm:$0xff] %v698
  %763 = vst [vmem:[%s3 + $0x158] sm:$0xff] %v699
  %764 = vst [vmem:[%s3 + $0x160] sm:$0xff] %v700
  %765 = vst [vmem:[%s3 + $0x168] sm:$0xff] %v701
  %766 = vst [vmem:[%s3 + $0x170] sm:$0xff] %v702
  %767 = vst [vmem:[%s3 + $0x178] sm:$0xff] %v703
  %768 = vst [vmem:[%s3 + $0x180] sm:$0xff] %v704
  %769 = vst [vmem:[%s3 + $0x188] sm:$0xff] %v705
  %770 = vst [vmem:[%s3 + $0x190] sm:$0xff] %v706
  %771 = vst [vmem:[%s3 + $0x198] sm:$0xff] %v707
  %772 = vst [vmem:[%s3 + $0x1a0] sm:$0xff] %v708
  %773 = vst [vmem:[%s3 + $0x1a8] sm:$0xff] %v709
  %774 = vst [vmem:[%s3 + $0x1b0] sm:$0xff] %v710
  %775 = vst [vmem:[%s3 + $0x1b8] sm:$0xff] %v711
  %776 = vst [vmem:[%s3 + $0x1c0] sm:$0xff] %v712
  %777 = vst [vmem:[%s3 + $0x1c8] sm:$0xff] %v713
  %778 = vst [vmem:[%s3 + $0x1d0] sm:$0xff] %v714
  %779 = vst [vmem:[%s3 + $0x1d8] sm:$0xff] %v715
  %780 = vst [vmem:[%s3 + $0x1e0] sm:$0xff] %v716
  %781 = vst [vmem:[%s3 + $0x1e8] sm:$0xff] %v717
  %782 = vst [vmem:[%s3 + $0x1f0] sm:$0xff] %v718
  %783 = vst [vmem:[%s3 + $0x1f8] sm:$0xff] %v719
  // Predicated region
  $region14: #{cbr_forward.1} parent=0 // pred_check
    _
  $region15: #{cbr_forward.1} parent=0 // pred_check_branch
    %785 = sbr.rel (0) target = $region17
  $region16: #{cbr_forward.1} parent=0 // pred_region
    _
  $region17: #{cbr_forward.1} parent=0 // pred_fallthru
    _
  // Predicated region
  $region18: #{cbr_forward.1} parent=0 // pred_check
    _
  $region19: #{cbr_forward.1} parent=0 // pred_check_branch
    %787 = sbr.rel (0) target = $region21
  $region20: #{cbr_forward.1} parent=0 // pred_region
    _
  $region21: #{cbr_forward.1} parent=0 // pred_fallthru
    _

</llo_original>
